<compile_context>
chip_gen: v6e
topology: v6e:2x2x1
jax: 0.10.0
libtpu: 0.0.40
codegen_flags: <defaults>
</compile_context>

<pallas_src>
import functools

import jax
import jax.numpy as jnp
from jax.experimental import pallas as pl
from jax.experimental.pallas import tpu as pltpu

_LANE = 128
_SUBLANE = 8


def _pool_sum_kernel(x_ref, o_ref, *, thw, hw_true):
    # x_ref: (TR, THW) input tile (native dtype); o_ref: (TR, 1) f32 accumulator
    h = pl.program_id(1)

    @pl.when(h == 0)
    def _():
        o_ref[...] = jnp.zeros_like(o_ref)

    x = x_ref[...].astype(jnp.float32)
    # Mask lanes past the true H*W extent (tail tile when H*W % THW != 0).
    lane = jax.lax.broadcasted_iota(jnp.int32, x.shape, dimension=1) + h * thw
    x = jnp.where(lane < hw_true, x, 0.0)
    o_ref[...] += jnp.sum(x, axis=-1, keepdims=True)


def _finalize_kernel(s_ref, w_ref, shift_ref, o_ref):
    # s_ref: (N, Cin) pooled sums; w_ref: (Cin, Cout) folded weight
    # (already carries 1/(H*W) and the BN scale); shift_ref: (1, Cout)
    y = jnp.dot(s_ref[...], w_ref[...], preferred_element_type=jnp.float32)
    o_ref[...] = jnp.maximum(y + shift_ref[...], 0.0)


def _round_up(x, m):
    return ((x + m - 1) // m) * m


def aspp_pooling(x_nchw, conv_weight, bn_gamma, bn_beta,
                 bn_running_mean, bn_running_var, eps=1e-5):
    """x_nchw: (N, Cin, H, W); conv_weight: (Cout, Cin, 1, 1). Returns (N, Cout, 1, 1) f32."""
    N, Cin, H, W = x_nchw.shape
    Cout = conv_weight.shape[0]
    HW = H * W
    R = N * Cin

    # ---------- Phase 1: tiled spatial sum-reduction (memory bound) ----------
    x2d = x_nchw.reshape(R, HW)                       # free reshape, native dtype
    itemsize = jnp.dtype(x2d.dtype).itemsize

    # H*W tile: multiple of 128 lanes, capped at 1024 (tail handled by in-kernel mask).
    thw = min(1024, _round_up(HW, _LANE))
    # Row tile: multiple of 8, sized so one input tile stays around ~4 MiB
    # (x2 double-buffering fits comfortably in scoped VMEM on v5e/v6e/v7x).
    tile_bytes = 4 * 1024 * 1024
    tr_cap = max(_SUBLANE, (tile_bytes // (thw * itemsize)) // _SUBLANE * _SUBLANE)
    tr = min(_round_up(R, _SUBLANE), tr_cap)

    grid = (pl.cdiv(R, tr), pl.cdiv(HW, thw))         # rows parallel, reduction last

    pooled_sum = pl.pallas_call(
        functools.partial(_pool_sum_kernel, thw=thw, hw_true=HW),
        out_shape=jax.ShapeDtypeStruct((R, 1), jnp.float32),
        grid=grid,
        in_specs=[pl.BlockSpec((tr, thw), lambda r, h: (r, h))],
        out_specs=pl.BlockSpec((tr, 1), lambda r, h: (r, 0)),
        compiler_params=pltpu.CompilerParams(
            dimension_semantics=("parallel", "arbitrary"),
            vmem_limit_bytes=32 * 1024 * 1024),
        cost_estimate=pl.CostEstimate(
            flops=R * HW, transcendentals=0,
            bytes_accessed=R * HW * itemsize + R * 4),
    )(x2d)

    # ---------- Phase 2: tiny finalize (1x1 conv + BN affine + ReLU) ----------
    scale = (bn_gamma / jnp.sqrt(bn_running_var + eps)).astype(jnp.float32)      # (Cout,)
    shift = (bn_beta - bn_running_mean * scale).astype(jnp.float32).reshape(1, Cout)
    # Fold 1/(H*W) and the BN scale into the conv weight (done once, tiny).
    w_folded = (conv_weight.reshape(Cout, Cin).T.astype(jnp.float32)
                * scale[None, :]) / float(HW)                                    # (Cin, Cout)

    pooled_sum = pooled_sum.reshape(N, Cin)

    out = pl.pallas_call(
        _finalize_kernel,
        out_shape=jax.ShapeDtypeStruct((N, Cout), jnp.float32),
        grid=(1,),
        in_specs=[
            pl.BlockSpec((N, Cin), lambda i: (0, 0)),
            pl.BlockSpec((Cin, Cout), lambda i: (0, 0)),
            pl.BlockSpec((1, Cout), lambda i: (0, 0)),
        ],
        out_specs=pl.BlockSpec((N, Cout), lambda i: (0, 0)),
        compiler_params=pltpu.CompilerParams(
            dimension_semantics=("arbitrary",)),
    )(pooled_sum, w_folded, shift)

    return out.reshape(N, Cout, 1, 1)


if __name__ == "__main__":
    key = jax.random.PRNGKey(0)
    k_x, k_w, k_g, k_b = jax.random.split(key, 4)

    N, Cin, H, W = 2, 4, 16, 16
    Cout = 8

    x = jax.random.normal(k_x, (N, Cin, H, W), dtype=jnp.float32)
    conv_weight = jax.random.normal(k_w, (Cout, Cin, 1, 1), dtype=jnp.float32) * 0.1
    bn_gamma = 1.0 + 0.1 * jax.random.normal(k_g, (Cout,), dtype=jnp.float32)
    bn_beta = 0.1 * jax.random.normal(k_b, (Cout,), dtype=jnp.float32)
    bn_running_mean = jnp.zeros((Cout,), dtype=jnp.float32)
    bn_running_var = jnp.ones((Cout,), dtype=jnp.float32)

    out = aspp_pooling(x, conv_weight, bn_gamma, bn_beta,
                       bn_running_mean, bn_running_var)
    jax.block_until_ready(out)

    # Pure-JAX reference (same eval-mode BN semantics).
    pooled = jnp.mean(x, axis=(2, 3))                                # (N, Cin)
    y_ref = pooled @ conv_weight.reshape(Cout, Cin).T                # (N, Cout)
    scale = bn_gamma / jnp.sqrt(bn_running_var + 1e-5)
    shift = bn_beta - bn_running_mean * scale
    y_ref = jnp.maximum(y_ref * scale + shift, 0.0).reshape(N, Cout, 1, 1)
    assert jnp.allclose(out, y_ref, atol=1e-5, rtol=1e-5), "mismatch vs reference"

    print("KERNEL_OK")
</pallas_src>

<mosaic_0001>
module attributes {stable_mosaic.version = 11 : i64} {
  func.func @_pool_sum_kernel(%arg0: i32, %arg1: i32, %arg2: memref<8x256xf32, #tpu.memory_space<vmem>>, %arg3: memref<8x1xf32, #tpu.memory_space<vmem>>) attributes {dimension_semantics = [#tpu.dimension_semantics<parallel>, #tpu.dimension_semantics<arbitrary>], iteration_bounds = array<i64: 1, 1>, scalar_prefetch = 0 : i64, scratch_operands = 0 : i64, tpu.core_type = #tpu.core_type<tc>, window_params = [{transform_indices = @transform_0, window_bounds = array<i64: 8, 256>}, {transform_indices = @transform_1, window_bounds = array<i64: 8, 1>}]} {
    %c0_i32 = arith.constant 0 : i32
    %0 = arith.cmpi eq, %arg1, %c0_i32 : i32
    %1 = arith.extui %0 : i1 to i32
    %c0_i32_0 = arith.constant 0 : i32
    %2 = arith.cmpi ne, %1, %c0_i32_0 : i32
    scf.if %2 {
      %cst_8 = arith.constant 0.000000e+00 : f32
      %17 = vector.broadcast %cst_8 : f32 to vector<8x1xf32>
      %c0_9 = arith.constant 0 : index
      %c0_10 = arith.constant 0 : index
      %18 = vector.load %arg3[%c0_9, %c0_10] : memref<8x1xf32, #tpu.memory_space<vmem>>, vector<8x1xf32>
      tpu.vector_store %arg3[%c0_9, %c0_10], %17 {strides = array<i32>} : memref<8x1xf32, #tpu.memory_space<vmem>>, vector<8x1xf32>,
    } else {
    }
    %c0 = arith.constant 0 : index
    %c0_1 = arith.constant 0 : index
    %3 = vector.load %arg2[%c0, %c0_1] : memref<8x256xf32, #tpu.memory_space<vmem>>, vector<8x256xf32>
    %4 = tpu.iota {dimensions = array<i32: 1>} : vector<8x256xi32>
    %c256_i32 = arith.constant 256 : i32
    %5 = arith.muli %arg1, %c256_i32 : i32
    %6 = vector.broadcast %5 : i32 to vector<8x256xi32>
    %7 = arith.addi %4, %6 : vector<8x256xi32>
    %c256_i32_2 = arith.constant 256 : i32
    %8 = vector.broadcast %c256_i32_2 : i32 to vector<8x256xi32>
    %9 = arith.cmpi slt, %7, %8 : vector<8x256xi32>
    %cst = arith.constant 0.000000e+00 : f32
    %10 = vector.broadcast %cst : f32 to vector<8x256xf32>
    %11 = arith.select %9, %3, %10 : vector<8x256xi1>, vector<8x256xf32>
    %c0_3 = arith.constant 0 : index
    %c0_4 = arith.constant 0 : index
    %12 = vector.load %arg3[%c0_3, %c0_4] : memref<8x1xf32, #tpu.memory_space<vmem>>, vector<8x1xf32>
    %cst_5 = arith.constant dense<0.000000e+00> : vector<8xf32>
    %13 = vector.multi_reduction <add>, %11, %cst_5 [1] : vector<8x256xf32> to vector<8xf32>
    %14 = vector.shape_cast %13 : vector<8xf32> to vector<8x1xf32>
    %15 = arith.addf %12, %14 : vector<8x1xf32>
    %c0_6 = arith.constant 0 : index
    %c0_7 = arith.constant 0 : index
    %16 = vector.load %arg3[%c0_6, %c0_7] : memref<8x1xf32, #tpu.memory_space<vmem>>, vector<8x1xf32>
    tpu.vector_store %arg3[%c0_6, %c0_7], %15 {strides = array<i32>} : memref<8x1xf32, #tpu.memory_space<vmem>>, vector<8x1xf32>,
    return
  }
  func.func @transform_0(%arg0: i32, %arg1: i32) -> (i32, i32) {
    %c0_i32 = arith.constant 0 : i32
    return %arg0, %arg1 : i32, i32
  }
  func.func @transform_1(%arg0: i32, %arg1: i32) -> (i32, i32) {
    %c0_i32 = arith.constant 0 : i32
    %c0_i32_0 = arith.constant 0 : i32
    return %arg0, %c0_i32 : i32, i32
  }
}

</mosaic_0001>

<llo_original>
// kernel: tpu_custom_call.1
$region0: #{tpu_custom_call.1}
  #allocation0 [shape = 'u32[]', space=smem, size = 0x4, offset = 0x4, fixed_abs, tag = 'smem constant byte address 0x4 - core index']
  #allocation1 [shape = 'u32[144,128]{1,0:T(1,128)}', space=vmem, size = 0x12000, scoped, tag = 'internal scratch']
  %s0 = inlined_call_operand.hbm [shape: f32[8,256], index: 0, kind: input, shape index: {}]
  %s1 = inlined_call_operand.vmem [shape: f32[8,1], index: 1, kind: output, shape index: {}]
  %s2 = sld [smem:[#allocation0]]
  $region22: #{tpu_custom_call.1} parent=0
    _
  %s4 = ssub.s32 1, %s2
  %s5 = scalar_select 0, %s4, %s2
  $region1: #{tpu_custom_call.1} parent=0
    #allocation2 [shape = 'u8[8192]{0}', space=vmem, size = 0x2000, scoped, tag = 'input window, operand 0, single buffered']
    #allocation3 [shape = 's32[1]{0}', space=sflag, size = 0x4, scoped, tag = 'scoped memory for tpu_custom_call.1']
    %6 = vsyncpa [#allocation3], 0
    // Predicated region
    $region2: #{tpu_custom_call.1} parent=1 // pred_check
      _
    $region3: #{tpu_custom_call.1} parent=1 // pred_check_branch
      %8 = sbr.rel (0) target = $region5
    $region4: #{tpu_custom_call.1} parent=1 // pred_region
      %s10 = ssub.s32 256, 256
      %11 = vsyncadd [#allocation3], %s10
      %s13 = sshll.u32 [#allocation2], 4
      %s14 = int_to_ptr.vmem [resolvable:$true] %s13
      %16 = dma.hbm_to_vmem [thread:$0]  %s0, 256, %s14, [#allocation3]
    $region5: #{tpu_custom_call.1} parent=1 // pred_fallthru
      _
    // Predicated region
    $region6: #{tpu_custom_call.1} parent=1 // pred_check
      _
    $region7: #{tpu_custom_call.1} parent=1 // pred_check_branch
      %18 = sbr.rel (0) target = $region9
    $region8: #{tpu_custom_call.1} parent=1 // pred_region
      %19 = dma.done [#allocation3], 256
    $region9: #{tpu_custom_call.1} parent=1 // pred_fallthru
      _
    %p20 = scmp.eq.s32.totalorder 0, 0
    // Predicated region
    $region10: #{tpu_custom_call.1} parent=1 // pred_check
      %p21 = pneg %p20
    $region11: #{tpu_custom_call.1} parent=1 // pred_check_branch
      %23 = sbr.rel (%p21) target = $region13
    $region12: #{tpu_custom_call.1} parent=1 // pred_region
      %vm24 = vcmask 7168
      %25 = vst.msk [vmem:[%s1] sm:$0xff] %vm24, 0.0
    $region13: #{tpu_custom_call.1} parent=1 // pred_fallthru
      _
    %v26 = vld [vmem:[#allocation2] sm:$0xff]
    %v27 = vld [vmem:[#allocation2 + $0x8] sm:$0xff]
    %v28 = vlaneseq
    %v29 = vand.u32 %v28, 127
    %v30 = vadd.s32 %v29, 128
    %s31 = smul.u32 0, 256
    %v32 = vstv %s31
    %v33 = vadd.s32 %v29, %v32
    %v34 = vadd.s32 %v30, %v32
    %vm35 = vcmp.lt.s32.totalorder %v33, 256
    %vm36 = vcmp.lt.s32.totalorder %v34, 256
    %v37 = vsel %vm35, %v26, 0.0
    %v38 = vsel %vm36, %v27, 0.0
    %v39 = vld [vmem:[%s1] sm:$0xff]
    %v40 = vadd.f32 %v37, %v38
    %41 = vadd.xlane.f32.xlu0 %v40
    %v42 = vpop.xlane.xlu0 %41
    %v43 = vadd.f32 %v39, %v42
    %vm44 = vcmask 7168
    %45 = vst.msk [vmem:[%s1] sm:$0xff] %vm44, %v43
    // Predicated region
    $region14: #{tpu_custom_call.1} parent=1 // pred_check
      _
    $region15: #{tpu_custom_call.1} parent=1 // pred_check_branch
      %47 = sbr.rel (0) target = $region17
    $region16: #{tpu_custom_call.1} parent=1 // pred_region
      _
    $region17: #{tpu_custom_call.1} parent=1 // pred_fallthru
      _
    // Predicated region
    $region18: #{tpu_custom_call.1} parent=1 // pred_check
      _
    $region19: #{tpu_custom_call.1} parent=1 // pred_check_branch
      %49 = sbr.rel (0) target = $region21
    $region20: #{tpu_custom_call.1} parent=1 // pred_region
      _
    $region21: #{tpu_custom_call.1} parent=1 // pred_fallthru
      _
    %50 = vsyncpa [#allocation3], 1

</llo_original>
